<compile_context>
chip_gen: v7x
topology: tpu7x:2x2x1
jax: 0.10.0
libtpu: 0.0.40
codegen_flags: <defaults>
</compile_context>

<pallas_src>
import functools

import jax
import jax.numpy as jnp
from jax.experimental import pallas as pl
from jax.experimental.pallas import tpu as pltpu

EPS = 1e-3
LANES = 128
MAX_BLOCK_ROWS = 4096  # 4096 * 128 * 4B = 2 MiB per f32 input block


def _round_up(a: int, b: int) -> int:
    return -(-a // b) * b


def _charbonnier_kernel(x_ref, y_ref, o_ref, *, eps):
    step = pl.program_id(1)

    @pl.when(step == 0)
    def _():
        o_ref[...] = jnp.zeros_like(o_ref)

    diff = x_ref[...].astype(jnp.float32) - y_ref[...].astype(jnp.float32)
    val = jnp.sqrt(diff * diff + jnp.float32(eps * eps))
    # vreg-shaped partial sums: elementwise VPU adds per step; the single
    # cross-lane reduction is deferred to the wrapper.
    o_ref[...] += val.reshape(-1, 8, LANES).sum(axis=0)[None, :, :]


def charbonnier_loss(x, y, eps=EPS):
    assert x.shape == y.shape, (x.shape, y.shape)
    n_total = x.size
    itemsize = jnp.dtype(x.dtype).itemsize

    xf = x.reshape(-1)
    yf = y.reshape(-1)

    rows = -(-n_total // LANES)  # ceil-div
    block_rows = min(MAX_BLOCK_ROWS, _round_up(rows, 8))
    # Split across (up to) two TensorCores when there is enough work (v7x);
    # on single-TC chips the leading axis is just a 2-step loop.
    nsplit = 2 if rows >= 2 * block_rows else 1
    steps = -(-rows // (nsplit * block_rows))
    rows_padded = nsplit * steps * block_rows
    padded_len = rows_padded * LANES
    n_pad = padded_len - n_total

    if n_pad:
        xf = jnp.pad(xf, (0, n_pad))
        yf = jnp.pad(yf, (0, n_pad))
    xp = xf.reshape(rows_padded, LANES)
    yp = yf.reshape(rows_padded, LANES)

    # 2 inputs x 2 pipeline buffers x block_bytes + headroom; explicit so the
    # same blocks compile on v5e (16 MiB scoped default) and fit v7x (64 MiB).
    block_bytes = block_rows * LANES * itemsize
    vmem_limit = min(64 << 20, max(4 * block_bytes + (4 << 20), 16 << 20))

    cost = pl.CostEstimate(
        flops=3 * padded_len,
        transcendentals=padded_len,
        bytes_accessed=2 * padded_len * itemsize + nsplit * 8 * LANES * 4,
    )

    kernel = functools.partial(_charbonnier_kernel, eps=float(eps))

    partials = pl.pallas_call(
        kernel,
        out_shape=jax.ShapeDtypeStruct((nsplit, 8, LANES), jnp.float32),
        grid_spec=pltpu.PrefetchScalarGridSpec(
            num_scalar_prefetch=0,
            grid=(nsplit, steps),
            in_specs=[
                pl.BlockSpec((block_rows, LANES),
                             lambda c, s: (c * steps + s, 0)),
                pl.BlockSpec((block_rows, LANES),
                             lambda c, s: (c * steps + s, 0)),
            ],
            out_specs=pl.BlockSpec((1, 8, LANES), lambda c, s: (c, 0, 0)),
        ),
        compiler_params=pltpu.CompilerParams(
            dimension_semantics=("parallel", "arbitrary"),
            vmem_limit_bytes=vmem_limit,
        ),
        cost_estimate=cost,
    )(xp, yp)

    total = jnp.sum(partials)
    if n_pad:
        # Each zero-padded element contributed exactly sqrt(eps^2); remove it.
        total = total - jnp.float32(n_pad) * jnp.sqrt(jnp.float32(eps * eps))
    return total / jnp.float32(n_total)


if __name__ == "__main__":
    key = jax.random.PRNGKey(0)
    kx, ky = jax.random.split(key)
    # NCHW, matching the PyTorch module's expected image-tensor inputs
    x = jax.random.normal(kx, (2, 4, 16, 16), dtype=jnp.float32)
    y = jax.random.normal(ky, (2, 4, 16, 16), dtype=jnp.float32)

    loss = charbonnier_loss(x, y)
    jax.block_until_ready(loss)

    # reference check in plain JAX
    diff = x - y
    ref = jnp.mean(jnp.sqrt(diff * diff + jnp.float32(EPS * EPS)))
    assert jnp.allclose(loss, ref, rtol=1e-5, atol=1e-6), (loss, ref)

    print("KERNEL_OK")
</pallas_src>

<mosaic_0001>
module attributes {stable_mosaic.version = 11 : i64} {
  func.func @_charbonnier_kernel(%arg0: i32, %arg1: i32, %arg2: memref<16x128xf32, #tpu.memory_space<vmem>>, %arg3: memref<16x128xf32, #tpu.memory_space<vmem>>, %arg4: memref<1x8x128xf32, #tpu.memory_space<vmem>>) attributes {dimension_semantics = [#tpu.dimension_semantics<parallel>, #tpu.dimension_semantics<arbitrary>], iteration_bounds = array<i64: 1, 1>, scalar_prefetch = 0 : i64, scratch_operands = 0 : i64, tpu.core_type = #tpu.core_type<tc>, window_params = [{transform_indices = @transform_0, window_bounds = array<i64: 16, 128>}, {transform_indices = @transform_1, window_bounds = array<i64: 16, 128>}, {transform_indices = @transform_2, window_bounds = array<i64: 1, 8, 128>}]} {
    %c0_i32 = arith.constant 0 : i32
    %0 = arith.cmpi eq, %arg1, %c0_i32 : i32
    %1 = arith.extui %0 : i1 to i32
    %c0_i32_0 = arith.constant 0 : i32
    %2 = arith.cmpi ne, %1, %c0_i32_0 : i32
    scf.if %2 {
      %cst_11 = arith.constant 0.000000e+00 : f32
      %16 = vector.broadcast %cst_11 : f32 to vector<1x8x128xf32>
      %c0_12 = arith.constant 0 : index
      %c0_13 = arith.constant 0 : index
      %c0_14 = arith.constant 0 : index
      %17 = vector.load %arg4[%c0_12, %c0_13, %c0_14] : memref<1x8x128xf32, #tpu.memory_space<vmem>>, vector<1x8x128xf32>
      tpu.vector_store %arg4[%c0_12, %c0_13, %c0_14], %16 {strides = array<i32>} : memref<1x8x128xf32, #tpu.memory_space<vmem>>, vector<1x8x128xf32>,
    } else {
    }
    %c0 = arith.constant 0 : index
    %c0_1 = arith.constant 0 : index
    %3 = vector.load %arg2[%c0, %c0_1] : memref<16x128xf32, #tpu.memory_space<vmem>>, vector<16x128xf32>
    %c0_2 = arith.constant 0 : index
    %c0_3 = arith.constant 0 : index
    %4 = vector.load %arg3[%c0_2, %c0_3] : memref<16x128xf32, #tpu.memory_space<vmem>>, vector<16x128xf32>
    %5 = arith.subf %3, %4 : vector<16x128xf32>
    %6 = arith.mulf %5, %5 : vector<16x128xf32>
    %cst = arith.constant 9.99999997E-7 : f32
    %7 = vector.broadcast %cst : f32 to vector<16x128xf32>
    %8 = arith.addf %6, %7 : vector<16x128xf32>
    %9 = math.sqrt %8 : vector<16x128xf32>
    %c0_4 = arith.constant 0 : index
    %c0_5 = arith.constant 0 : index
    %c0_6 = arith.constant 0 : index
    %10 = vector.load %arg4[%c0_4, %c0_5, %c0_6] : memref<1x8x128xf32, #tpu.memory_space<vmem>>, vector<1x8x128xf32>
    %11 = vector.shape_cast %9 : vector<16x128xf32> to vector<2x8x128xf32>
    %cst_7 = arith.constant dense<0.000000e+00> : vector<8x128xf32>
    %12 = vector.multi_reduction <add>, %11, %cst_7 [0] : vector<2x8x128xf32> to vector<8x128xf32>
    %13 = vector.shape_cast %12 : vector<8x128xf32> to vector<1x8x128xf32>
    %14 = arith.addf %10, %13 : vector<1x8x128xf32>
    %c0_8 = arith.constant 0 : index
    %c0_9 = arith.constant 0 : index
    %c0_10 = arith.constant 0 : index
    %15 = vector.load %arg4[%c0_8, %c0_9, %c0_10] : memref<1x8x128xf32, #tpu.memory_space<vmem>>, vector<1x8x128xf32>
    tpu.vector_store %arg4[%c0_8, %c0_9, %c0_10], %14 {strides = array<i32>} : memref<1x8x128xf32, #tpu.memory_space<vmem>>, vector<1x8x128xf32>,
    return
  }
  func.func @transform_0(%arg0: i32, %arg1: i32) -> (i32, i32) {
    %c1_i32 = arith.constant 1 : i32
    %0 = arith.muli %arg0, %c1_i32 : i32
    %1 = arith.addi %0, %arg1 : i32
    %c0_i32 = arith.constant 0 : i32
    %c0_i32_0 = arith.constant 0 : i32
    return %1, %c0_i32 : i32, i32
  }
  func.func @transform_1(%arg0: i32, %arg1: i32) -> (i32, i32) {
    %c1_i32 = arith.constant 1 : i32
    %0 = arith.muli %arg0, %c1_i32 : i32
    %1 = arith.addi %0, %arg1 : i32
    %c0_i32 = arith.constant 0 : i32
    %c0_i32_0 = arith.constant 0 : i32
    return %1, %c0_i32 : i32, i32
  }
  func.func @transform_2(%arg0: i32, %arg1: i32) -> (i32, i32, i32) {
    %c0_i32 = arith.constant 0 : i32
    %c0_i32_0 = arith.constant 0 : i32
    %c0_i32_1 = arith.constant 0 : i32
    return %arg0, %c0_i32, %c0_i32_0 : i32, i32, i32
  }
}

</mosaic_0001>

<llo_original>
// kernel: tpu_custom_call.1
$region0: #{tpu_custom_call.1}
  #allocation0 [shape = 'u32[]', space=smem, size = 0x4, offset = 0x4, fixed_abs, tag = 'smem constant byte address 0x4 - core index']
  #allocation1 [shape = 'u32[144,128]{1,0:T(1,128)}', space=vmem, size = 0x12000, scoped, tag = 'internal scratch']
  %s0 = inlined_call_operand.hbm [shape: f32[16,128], index: 0, kind: input, shape index: {}]
  %s1 = inlined_call_operand.hbm [shape: f32[16,128], index: 1, kind: input, shape index: {}]
  %s2 = inlined_call_operand.hbm [shape: f32[1,8,128], index: 2, kind: output, shape index: {}]
  %s3 = sld [smem:[#allocation0]]
  $region30: #{tpu_custom_call.1} parent=0
    _
  %s5 = ssub.s32 1, %s3
  %s6 = scalar_select 0, %s5, %s3
  $region1: #{tpu_custom_call.1} parent=0
    #allocation2 [shape = 'u8[8192]{0}', space=vmem, size = 0x2000, scoped, tag = 'input window, operand 0, single buffered']
    #allocation3 [shape = 's32[1]{0}', space=sflag, size = 0x4, scoped, tag = 'scoped memory for tpu_custom_call.1']
    #allocation4 [shape = 's32[1]{0}', space=sflag, size = 0x4, scoped, tag = 'scoped memory for tpu_custom_call.1']
    #allocation5 [shape = 'u8[8192]{0}', space=vmem, size = 0x2000, scoped, tag = 'input window, operand 1, single buffered']
    #allocation6 [shape = 's32[1]{0}', space=sflag, size = 0x4, scoped, tag = 'scoped memory for tpu_custom_call.1']
    #allocation7 [shape = 'u8[4096]{0}', space=vmem, size = 0x1000, scoped, tag = 'output window, operand 0, single buffered']
    %7 = vsyncpa [#allocation3], 0
    %8 = vsyncpa [#allocation6], 0
    %9 = vsyncpa [#allocation4], 0
    // Predicated region
    $region2: #{tpu_custom_call.1} parent=1 // pred_check
      _
    $region3: #{tpu_custom_call.1} parent=1 // pred_check_branch
      %11 = sbr.rel (0) target = $region5
    $region4: #{tpu_custom_call.1} parent=1 // pred_region
      %s12 = sadd.s32 0, 0
      %s13 = smul.u32 2, %s12
      %s15 = ssub.s32 256, 256
      %16 = vsyncadd [#allocation3], %s15
      %s17 = smul.addr %s13, 128
      %s18 = scalar_lea.hbm %s0, %s17
      %s19 = sshll.u32 [#allocation2], 4
      %s20 = int_to_ptr.vmem [resolvable:$true] %s19
      %25 = dma.hbm_to_vmem [thread:$0]  %s18, 256, %s20, [#allocation3], 128, 128, 8
    $region5: #{tpu_custom_call.1} parent=1 // pred_fallthru
      _
    // Predicated region
    $region6: #{tpu_custom_call.1} parent=1 // pred_check
      _
    $region7: #{tpu_custom_call.1} parent=1 // pred_check_branch
      %27 = sbr.rel (0) target = $region9
    $region8: #{tpu_custom_call.1} parent=1 // pred_region
      %s28 = sadd.s32 0, 0
      %s29 = smul.u32 2, %s28
      %s31 = ssub.s32 256, 256
      %32 = vsyncadd [#allocation6], %s31
      %s33 = smul.addr %s29, 128
      %s34 = scalar_lea.hbm %s1, %s33
      %s35 = sshll.u32 [#allocation5], 4
      %s36 = int_to_ptr.vmem [resolvable:$true] %s35
      %41 = dma.hbm_to_vmem [thread:$0]  %s34, 256, %s36, [#allocation6], 128, 128, 8
    $region9: #{tpu_custom_call.1} parent=1 // pred_fallthru
      _
    // Predicated region
    $region10: #{tpu_custom_call.1} parent=1 // pred_check
      _
    $region11: #{tpu_custom_call.1} parent=1 // pred_check_branch
      %43 = sbr.rel (0) target = $region13
    $region12: #{tpu_custom_call.1} parent=1 // pred_region
      %44 = dma.done [#allocation3], 256
    $region13: #{tpu_custom_call.1} parent=1 // pred_fallthru
      _
    // Predicated region
    $region14: #{tpu_custom_call.1} parent=1 // pred_check
      _
    $region15: #{tpu_custom_call.1} parent=1 // pred_check_branch
      %46 = sbr.rel (0) target = $region17
    $region16: #{tpu_custom_call.1} parent=1 // pred_region
      %47 = dma.done [#allocation6], 256
    $region17: #{tpu_custom_call.1} parent=1 // pred_fallthru
      _
    %s48 = sadd.s32 0, 0
    %s49 = smul.u32 2, %s48
    %s50 = sadd.s32 0, 0
    %s51 = smul.u32 2, %s50
    %p52 = scmp.eq.s32.totalorder 0, 0
    // Predicated region
    $region18: #{tpu_custom_call.1} parent=1 // pred_check
      %p53 = pneg %p52
    $region19: #{tpu_custom_call.1} parent=1 // pred_check_branch
      %55 = sbr.rel (%p53) target = $region21
    $region20: #{tpu_custom_call.1} parent=1 // pred_region
      %56 = vst [vmem:[#allocation7] sm:$0xff] 0.0
    $region21: #{tpu_custom_call.1} parent=1 // pred_fallthru
      _
    %v57 = vld [vmem:[#allocation2] sm:$0xff]
    %v58 = vld [vmem:[#allocation2 + $0x8] sm:$0xff]
    %v59 = vld [vmem:[#allocation5] sm:$0xff]
    %v60 = vld [vmem:[#allocation5 + $0x8] sm:$0xff]
    %v61 = vsub.f32 %v57, %v59
    %v62 = vsub.f32 %v58, %v60
    %v63 = vmul.f32 %v61, %v61
    %v64 = vmul.f32 %v62, %v62
    %v65 = vadd.f32 %v63, 1e-06
    %v66 = vadd.f32 %v64, 1e-06
    %v67 = vrsqrt.pop %v65
    %v68 = vmul.f32 %v65, %v67
    %vm69 = vcmp.eq.f32.partialorder %v65, inf
    %v70 = vsel %vm69, %v65, %v68
    %vm71 = vcmp.eq.f32.partialorder %v65, 0.0
    %v72 = vand.u32 %v65, 2147483648
    %v73 = vsel %vm71, %v72, %v70
    %v74 = vrsqrt.pop %v66
    %v75 = vmul.f32 %v66, %v74
    %vm76 = vcmp.eq.f32.partialorder %v66, inf
    %v77 = vsel %vm76, %v66, %v75
    %vm78 = vcmp.eq.f32.partialorder %v66, 0.0
    %v79 = vand.u32 %v66, 2147483648
    %v80 = vsel %vm78, %v79, %v77
    %v81 = vld [vmem:[#allocation7] sm:$0xff]
    %v82 = vadd.f32 %v73, %v80
    %v83 = vadd.f32 %v81, %v82
    %84 = vst [vmem:[#allocation7] sm:$0xff] %v83
    // Predicated region
    $region22: #{tpu_custom_call.1} parent=1 // pred_check
      _
    $region23: #{tpu_custom_call.1} parent=1 // pred_check_branch
      %86 = sbr.rel (0) target = $region25
    $region24: #{tpu_custom_call.1} parent=1 // pred_region
      %s88 = ssub.s32 128, 128
      %89 = vsyncadd [#allocation4], %s88
      %s91 = sshll.u32 [#allocation7], 4
      %s92 = int_to_ptr.vmem [resolvable:$true] %s91
      %94 = dma.vmem_to_hbm [thread:$0]  %s92, 128, %s2, [#allocation4]
    $region25: #{tpu_custom_call.1} parent=1 // pred_fallthru
      _
    // Predicated region
    $region26: #{tpu_custom_call.1} parent=1 // pred_check
      _
    $region27: #{tpu_custom_call.1} parent=1 // pred_check_branch
      %96 = sbr.rel (0) target = $region29
    $region28: #{tpu_custom_call.1} parent=1 // pred_region
      %97 = dma.done [#allocation4], 128
    $region29: #{tpu_custom_call.1} parent=1 // pred_fallthru
      _
    %98 = vsyncpa [#allocation3], 1
    %99 = vsyncpa [#allocation6], 1
    %100 = vsyncpa [#allocation4], 1

</llo_original>
